<compile_context>
chip_gen: v7x
topology: tpu7x:2x2x1
jax: 0.10.0
libtpu: 0.0.40
codegen_flags: <defaults>
</compile_context>

<pallas_src>
import jax
import jax.numpy as jnp
from jax.experimental import pallas as pl
from jax.experimental.pallas import tpu as pltpu


# --------------------------------------------------------------------------------------
# Kernel
# --------------------------------------------------------------------------------------
def _circconv_matmul_kernel(x_ref, xs_ref, w_ref, skip_ref, o_ref):
    # x_ref   : (Np, K)  bf16  VMEM, resident across all M tiles (matmul LHS)
    # xs_ref  : (Np, TM) f32   VMEM, x columns matching this output tile (skip branch)
    # w_ref   : (K, TM)  bf16  VMEM, circulant weight column block (double-buffered)
    # skip_ref: (1,)     f32   SMEM, skip_connection_weight
    # o_ref   : (Np, TM) f32   VMEM
    conv = jnp.dot(x_ref[...], w_ref[...], preferred_element_type=jnp.float32)
    o_ref[...] = skip_ref[0] * xs_ref[...] + conv


# --------------------------------------------------------------------------------------
# Parameter preparation (run ONCE per weight, outside the per-forward hot path)
# --------------------------------------------------------------------------------------
def build_circulant_weight(weight, H):
    """weight: (Cout, Cin, H, H) Conv2d weights -> dense (Cin*H*H, Cout*H*H) f32.

    With the module's pad/conv/slice arithmetic the final output is
        out[b,co,i,j] = sum_{ci,u,v} w[co,ci,u,v] * x[b,ci,(i+u+1)%H,(j+v+1)%H]
    which equals x_flat @ W_big with
        W_big[(ci,r,c),(co,i,j)] = w[co,ci,(r-i-1)%H,(c-j-1)%H].
    """
    Cout, Cin, KH, KW = weight.shape
    assert KH == H and KW == H
    idx = jnp.arange(H)
    U = (idx[:, None] - idx[None, :] - 1) % H        # U[r, i] = (r - i - 1) % H
    W6 = weight[:, :, U]                             # (co, ci, r, i, v)
    W6 = W6[:, :, :, :, U]                           # (co, ci, r, i, c, j)
    W_big = jnp.transpose(W6, (1, 2, 4, 0, 3, 5))    # (ci, r, c, co, i, j)
    return W_big.reshape(Cin * H * H, Cout * H * H)


def prepare_circulant_weight(weight, H):
    """Build + cast to bf16.  Call once per weight update and reuse across forwards."""
    return build_circulant_weight(weight.astype(jnp.float32), H).astype(jnp.bfloat16)


# --------------------------------------------------------------------------------------
# Tiling / wrapper
# --------------------------------------------------------------------------------------
_VMEM_BUDGET = 24 * 1024 * 1024      # conservative working-set budget (fits v7x 64 MiB VMEM)
_VMEM_LIMIT = 32 * 1024 * 1024       # explicit scoped-VMEM limit (also raises v5e's 16 MiB default)


def _choose_tile_m(M, K, n_pad):
    """Largest lane-dense (multiple-of-128) M tile that fits the VMEM budget, capped at 2048."""
    if M % 128 != 0:
        return M                                     # untileable: take the full dim
    fixed = n_pad * K * 2                            # resident bf16 x
    per_col = 2 * K * 2 + 2 * n_pad * 4 + 2 * n_pad * 4   # 2x bf16 W col + 2x f32 xs + 2x f32 out
    avail = max(_VMEM_BUDGET - fixed, per_col * 128)
    tm = (avail // per_col) // 128 * 128
    tm = int(max(128, min(tm, 2048, M)))
    # Prefer >= 2 column tiles so the weight stream double-buffers against MXU work.
    if tm >= M and M >= 256:
        tm = int(max(128, (M // 2) // 128 * 128))
    return tm


def vamp_inverse_circconv_forward(x, w_big_bf16, skip_w):
    """x: (N, Cin, H, W) f32; w_big_bf16: (Cin*H*W, Cout*H*W) bf16; skip_w: () f32."""
    N, Cin, H, W = x.shape
    assert H == W, "module assumes square images"
    K, M = w_big_bf16.shape
    assert K == Cin * H * W
    Cout = M // (H * W)
    assert Cin == Cout and K == M, "skip connection requires in_chans == out_chans"

    # Pad batch to a multiple of 8 sublanes (padding rows are zero; sliced off below).
    n_pad = ((max(N, 8) + 7) // 8) * 8
    x_flat = x.reshape(N, K).astype(jnp.float32)
    if n_pad != N:
        x_flat = jnp.pad(x_flat, ((0, n_pad - N), (0, 0)))
    x_bf16 = x_flat.astype(jnp.bfloat16)
    skip = jnp.reshape(skip_w.astype(jnp.float32), (1,))

    tm = _choose_tile_m(M, K, n_pad)
    grid_m = pl.cdiv(M, tm)

    cost = pl.CostEstimate(
        flops=2 * n_pad * K * M,
        bytes_accessed=n_pad * K * 2 + K * M * 2 + 2 * n_pad * M * 4,
        transcendentals=0,
    )

    out_flat = pl.pallas_call(
        _circconv_matmul_kernel,
        out_shape=jax.ShapeDtypeStruct((n_pad, M), jnp.float32),
        grid_spec=pltpu.PrefetchScalarGridSpec(
            num_scalar_prefetch=0,
            grid=(grid_m,),
            in_specs=[
                pl.BlockSpec((n_pad, K), lambda j: (0, 0)),   # bf16 x, resident across M tiles
                pl.BlockSpec((n_pad, tm), lambda j: (0, j)),  # f32 x slice for the skip add
                pl.BlockSpec((K, tm), lambda j: (0, j)),      # bf16 circulant weight column block
                pl.BlockSpec(memory_space=pltpu.SMEM),        # skip scalar
            ],
            out_specs=pl.BlockSpec((n_pad, tm), lambda j: (0, j)),
        ),
        compiler_params=pltpu.CompilerParams(
            dimension_semantics=("parallel",),                # independent M tiles (megacore on v7x)
            vmem_limit_bytes=_VMEM_LIMIT,
        ),
        cost_estimate=cost,
    )(x_bf16, x_flat, w_big_bf16, skip)

    return out_flat[:N].reshape(N, Cout, H, W)


# --------------------------------------------------------------------------------------
# Pure-JAX reference (mirror of the PyTorch forward)
# --------------------------------------------------------------------------------------
def ref_forward(x, weight, skip_w, H):
    """Circular pad by H == 3x3 tile; conv pad=1; slice [2:2+H]; skip add."""
    y = x
    xp = jnp.tile(x, (1, 1, 3, 3))
    out = jax.lax.conv_general_dilated(
        xp, weight, window_strides=(1, 1), padding=((1, 1), (1, 1)),
        dimension_numbers=("NCHW", "OIHW", "NCHW"))
    out = out[:, :, 2:2 + H, 2:2 + H]
    return skip_w * y + out


if __name__ == "__main__":
    # small shapes consistent with the module: in_chans=out_chans=2, image_height=16
    N, C, H = 2, 2, 16
    key = jax.random.PRNGKey(0)
    k_x, k_w = jax.random.split(key)

    x = jax.random.normal(k_x, (N, C, H, H), dtype=jnp.float32)
    # deterministic Conv2d-style init (kaiming-like scale), bias=False as in the module
    fan_in = C * H * H
    weight = jax.random.normal(k_w, (C, C, H, H), dtype=jnp.float32) / jnp.sqrt(fan_in)
    skip_w = jnp.ones((), dtype=jnp.float32)   # skip_connection_weight init = 1

    # Circulant matrix built ONCE per weight (hoisted out of the forward hot path).
    w_big_bf16 = jax.block_until_ready(prepare_circulant_weight(weight, H))

    fwd = jax.jit(vamp_inverse_circconv_forward)
    out = jax.block_until_ready(fwd(x, w_big_bf16, skip_w))

    ref = ref_forward(x, weight, skip_w, H)
    assert out.shape == (N, C, H, H)
    err = float(jnp.max(jnp.abs(out - ref)))
    # bf16 weights with f32 accumulation: loosen tolerance accordingly
    assert jnp.allclose(out, ref, atol=5e-2, rtol=5e-2), err
    print("KERNEL_OK")
</pallas_src>

<mosaic_0001>
module attributes {stable_mosaic.version = 11 : i64} {
  func.func @_circconv_matmul_kernel(%arg0: i32, %arg1: memref<8x512xbf16, #tpu.memory_space<vmem>>, %arg2: memref<8x256xf32, #tpu.memory_space<vmem>>, %arg3: memref<512x256xbf16, #tpu.memory_space<vmem>>, %arg4: memref<1xf32, #tpu.memory_space<smem>>, %arg5: memref<8x256xf32, #tpu.memory_space<vmem>>) attributes {dimension_semantics = [#tpu.dimension_semantics<parallel>], iteration_bounds = array<i64: 2>, scalar_prefetch = 0 : i64, scratch_operands = 0 : i64, tpu.core_type = #tpu.core_type<tc>, window_params = [{pipeline_mode = #tpu.pipeline_mode<synchronous>, transform_indices = @transform_0, window_bounds = array<i64: 8, 512>}, {transform_indices = @transform_1, window_bounds = array<i64: 8, 256>}, {transform_indices = @transform_2, window_bounds = array<i64: 512, 256>}, {transform_indices = @transform_3, window_bounds = array<i64: 1>}, {transform_indices = @transform_4, window_bounds = array<i64: 8, 256>}]} {
    %c0 = arith.constant 0 : index
    %c0_0 = arith.constant 0 : index
    %0 = vector.load %arg1[%c0, %c0_0] : memref<8x512xbf16, #tpu.memory_space<vmem>>, vector<8x512xbf16>
    %c0_1 = arith.constant 0 : index
    %c0_2 = arith.constant 0 : index
    %1 = vector.load %arg3[%c0_1, %c0_2] : memref<512x256xbf16, #tpu.memory_space<vmem>>, vector<512x256xbf16>
    %cst = arith.constant dense<0.000000e+00> : vector<8x256xf32>
    %2 = tpu.matmul %0, %1, %cst {dimension_numbers = #tpu.dot_dimension_numbers<[1], [0], [0], [1], [0, 0, 1, 1], [], []>} : vector<8x512xbf16>, vector<512x256xbf16>, vector<8x256xf32> -> vector<8x256xf32>
    %c0_3 = arith.constant 0 : index
    %3 = memref.load %arg4[%c0_3] : memref<1xf32, #tpu.memory_space<smem>>
    %c0_4 = arith.constant 0 : index
    %c0_5 = arith.constant 0 : index
    %4 = vector.load %arg2[%c0_4, %c0_5] : memref<8x256xf32, #tpu.memory_space<vmem>>, vector<8x256xf32>
    %5 = vector.broadcast %3 : f32 to vector<8x256xf32>
    %6 = arith.mulf %5, %4 : vector<8x256xf32>
    %7 = arith.addf %6, %2 : vector<8x256xf32>
    %c0_6 = arith.constant 0 : index
    %c0_7 = arith.constant 0 : index
    %8 = vector.load %arg5[%c0_6, %c0_7] : memref<8x256xf32, #tpu.memory_space<vmem>>, vector<8x256xf32>
    tpu.vector_store %arg5[%c0_6, %c0_7], %7 {strides = array<i32>} : memref<8x256xf32, #tpu.memory_space<vmem>>, vector<8x256xf32>,
    return
  }
  func.func @transform_0(%arg0: i32) -> (i32, i32) {
    %c0_i32 = arith.constant 0 : i32
    %c0_i32_0 = arith.constant 0 : i32
    %c0_i32_1 = arith.constant 0 : i32
    return %c0_i32, %c0_i32_0 : i32, i32
  }
  func.func @transform_1(%arg0: i32) -> (i32, i32) {
    %c0_i32 = arith.constant 0 : i32
    %c0_i32_0 = arith.constant 0 : i32
    return %c0_i32, %arg0 : i32, i32
  }
  func.func @transform_2(%arg0: i32) -> (i32, i32) {
    %c0_i32 = arith.constant 0 : i32
    %c0_i32_0 = arith.constant 0 : i32
    return %c0_i32, %arg0 : i32, i32
  }
  func.func @transform_3(%arg0: i32) -> i32 {
    %c0_i32 = arith.constant 0 : i32
    %c0_i32_0 = arith.constant 0 : i32
    return %c0_i32 : i32
  }
  func.func @transform_4(%arg0: i32) -> (i32, i32) {
    %c0_i32 = arith.constant 0 : i32
    %c0_i32_0 = arith.constant 0 : i32
    return %c0_i32, %arg0 : i32, i32
  }
}

</mosaic_0001>

<llo_original>
// kernel: vamp_inverse_circconv_forward.1
$region0: #{vamp_inverse_circconv_forward.1}
  #allocation0 [shape = 'u32[]', space=smem, size = 0x4, offset = 0x4, fixed_abs, tag = 'smem constant byte address 0x4 - core index']
  #allocation1 [shape = 'u32[144,128]{1,0:T(1,128)}', space=vmem, size = 0x12000, scoped, tag = 'internal scratch']
  #allocation2 [shape = 'f32[1]{0:T(128)S(6)}', space=smem, size = 0x200, scoped, tag = 'scoped memory for vamp_inverse_circconv_forward.1']
  %s0 = inlined_call_operand.vmem [shape: bf16[8,512], index: 0, kind: input, shape index: {}]
  %s1 = inlined_call_operand.vmem [shape: f32[8,512], index: 1, kind: input, shape index: {}]
  %s2 = inlined_call_operand.hbm [shape: bf16[512,512], index: 2, kind: input, shape index: {}]
  %s3 = inlined_call_operand.<no memory space> [shape: f32[1], index: 3, kind: input, shape index: {}]
  %s4 = inlined_call_operand.vmem [shape: f32[8,512], index: 4, kind: output, shape index: {}]
  %s5 = sld [smem:[#allocation0]]
  $region53: #{vamp_inverse_circconv_forward.1} parent=0
    _
  %s7 = ssub.s32 1, %s5
  %s8 = scalar_select 0, %s7, %s5
  %9 = sst [smem:[#allocation2]] %s3
  $region1: #{vamp_inverse_circconv_forward.1} parent=0
    #allocation3 [shape = 'u8[524288]{0}', space=vmem, size = 0x80000, scoped, tag = 'input window, operand 2']
    #allocation4 [shape = 's32[2]{0}', space=sflag, size = 0x8, scoped, tag = 'scoped memory for vamp_inverse_circconv_forward.1']
    %10 = vsyncpa [#allocation4], 0
    %s11 = scalar_lea.sflag [#allocation4], 1
    %12 = vsyncpa %s11, 0
    loop: start=0, step=1, limit=4
    $region2: #{vamp_inverse_circconv_forward.1} parent=1 // loop_pre_header
      _
    $region3: #{vamp_inverse_circconv_forward.1} parent=1 // loop_header
      %s14 = sphi 0, %s18
      %p15 = scmp.ge.s32.totalorder %s14, 4
      %s22 = sphi 0, %s22
      %s24 = sphi 0, %s22
      %s25 = sphi 0, %s24
      %s39 = sphi 0, %s25
      %s45 = sphi 0, %s47
      %s48 = sphi 0, %s45
      %s49 = sphi 0, %s48
      %s65 = sphi 0, %s49
      %s71 = sphi 0, %s73
      %s74 = sphi 0, %s71
      %s75 = sphi 0, %s74
      %s91 = sphi 0, %s75
      %s95 = sphi 0, %s95
      %s97 = sphi 0, %s95
      %s98 = sphi 0, %s97
      %s112 = sphi 0, %s98
      %s118 = sphi 0, %s120
      %s121 = sphi 0, %s118
      %s122 = sphi 0, %s121
      %s138 = sphi 0, %s122
    $region4: #{vamp_inverse_circconv_forward.1} parent=1 // loop_header_branch
      %17 = sbr.rel (%p15) target = $region8
    $region5: #{vamp_inverse_circconv_forward.1} parent=1 // loop_body
      %s19 = ssub.s32 %s14, 1
      %s20 = ssub.s32 %s14, 2
      %s21 = sadd.s32 %s14, 1
      %s23 = sadd.s32 %s22, 1
      %p26 = scmp.eq.s32.totalorder %s14, 1
      %p27 = scmp.ne.s32.totalorder %s22, %s24
      %p28 = scmp.eq.s32.totalorder %s14, 0
      %p29 = por %p27, %p28
      %p30 = scmp.ne.s32.totalorder %s22, %s24
      %p31 = scmp.eq.s32.totalorder %s19, 1
      %p32 = por %p30, %p31
      %p33 = scmp.ne.s32.totalorder %s24, %s25
      %p34 = scmp.eq.s32.totalorder %s19, 0
      %p35 = por %p33, %p34
      %p36 = scmp.ne.s32.totalorder %s24, %s25
      %p37 = scmp.eq.s32.totalorder %s20, 1
      %p38 = por %p36, %p37
      %p40 = scmp.ne.s32.totalorder %s25, %s39
      %p41 = scmp.eq.s32.totalorder %s20, 0
      %p42 = por %p40, %p41
      %s43 = ssub.s32 %s14, %s21
      %p44 = scmp.eq.s32.totalorder %s43, 0
      %s46 = sadd.s32 %s45, 1
      %s47 = scalar_select %p44, %s45, %s46
      %p50 = pneg %p44
      %p51 = scmp.eq.s32.totalorder %s14, 1
      %p52 = por %p50, %p51
      %p53 = scmp.ne.s32.totalorder %s45, %s48
      %p54 = scmp.eq.s32.totalorder %s14, 0
      %p55 = por %p53, %p54
      %p56 = scmp.ne.s32.totalorder %s45, %s48
      %p57 = scmp.eq.s32.totalorder %s19, 1
      %p58 = por %p56, %p57
      %p59 = scmp.ne.s32.totalorder %s48, %s49
      %p60 = scmp.eq.s32.totalorder %s19, 0
      %p61 = por %p59, %p60
      %p62 = scmp.ne.s32.totalorder %s48, %s49
      %p63 = scmp.eq.s32.totalorder %s20, 1
      %p64 = por %p62, %p63
      %p66 = scmp.ne.s32.totalorder %s49, %s65
      %p67 = scmp.eq.s32.totalorder %s20, 0
      %p68 = por %p66, %p67
      %s69 = ssub.s32 %s14, %s21
      %p70 = scmp.eq.s32.totalorder %s69, 0
      %s72 = sadd.s32 %s71, 1
      %s73 = scalar_select %p70, %s71, %s72
      %p76 = pneg %p70
      %p77 = scmp.eq.s32.totalorder %s14, 1
      %p78 = por %p76, %p77
      %p79 = scmp.ne.s32.totalorder %s71, %s74
      %p80 = scmp.eq.s32.totalorder %s14, 0
      %p81 = por %p79, %p80
      %p82 = scmp.ne.s32.totalorder %s71, %s74
      %p83 = scmp.eq.s32.totalorder %s19, 1
      %p84 = por %p82, %p83
      %p85 = scmp.ne.s32.totalorder %s74, %s75
      %p86 = scmp.eq.s32.totalorder %s19, 0
      %p87 = por %p85, %p86
      %p88 = scmp.ne.s32.totalorder %s74, %s75
      %p89 = scmp.eq.s32.totalorder %s20, 1
      %p90 = por %p88, %p89
      %p92 = scmp.ne.s32.totalorder %s75, %s91
      %p93 = scmp.eq.s32.totalorder %s20, 0
      %p94 = por %p92, %p93
      %s96 = sadd.s32 %s95, 1
      %p99 = scmp.eq.s32.totalorder %s14, 1
      %p100 = scmp.ne.s32.totalorder %s95, %s97
      %p101 = scmp.eq.s32.totalorder %s14, 0
      %p102 = por %p100, %p101
      %p103 = scmp.ne.s32.totalorder %s95, %s97
      %p104 = scmp.eq.s32.totalorder %s19, 1
      %p105 = por %p103, %p104
      %p106 = scmp.ne.s32.totalorder %s97, %s98
      %p107 = scmp.eq.s32.totalorder %s19, 0
      %p108 = por %p106, %p107
      %p109 = scmp.ne.s32.totalorder %s97, %s98
      %p110 = scmp.eq.s32.totalorder %s20, 1
      %p111 = por %p109, %p110
      %p113 = scmp.ne.s32.totalorder %s98, %s112
      %p114 = scmp.eq.s32.totalorder %s20, 0
      %p115 = por %p113, %p114
      %s116 = ssub.s32 %s14, %s21
      %p117 = scmp.eq.s32.totalorder %s116, 0
      %s119 = sadd.s32 %s118, 1
      %s120 = scalar_select %p117, %s118, %s119
      %p123 = pneg %p117
      %p124 = scmp.eq.s32.totalorder %s14, 1
      %p125 = por %p123, %p124
      %p126 = scmp.ne.s32.totalorder %s118, %s121
      %p127 = scmp.eq.s32.totalorder %s14, 0
      %p128 = por %p126, %p127
      %p129 = scmp.ne.s32.totalorder %s118, %s121
      %p130 = scmp.eq.s32.totalorder %s19, 1
      %p131 = por %p129, %p130
      %p132 = scmp.ne.s32.totalorder %s121, %s122
      %p133 = scmp.eq.s32.totalorder %s19, 0
      %p134 = por %p132, %p133
      %p135 = scmp.ne.s32.totalorder %s121, %s122
      %p136 = scmp.eq.s32.totalorder %s20, 1
      %p137 = por %p135, %p136
      %p139 = scmp.ne.s32.totalorder %s122, %s138
      %p140 = scmp.eq.s32.totalorder %s20, 0
      %p141 = por %p139, %p140
      %p142 = scmp.le.s32.totalorder 1, %s14
      %p143 = scmp.lt.s32.totalorder %s14, 3
      %p144 = pnand %p142, %p143
      %p145 = pneg %p144
      // Predicated region
      $region9: #{vamp_inverse_circconv_forward.1} parent=5 // pred_check
        _
      $region10: #{vamp_inverse_circconv_forward.1} parent=5 // pred_check_branch
        %147 = sbr.rel (%p144) target = $region12
      $region11: #{vamp_inverse_circconv_forward.1} parent=5 // pred_region
        %s148 = ssub.s32 %s14, 1
        // Predicated region
        $region13: #{vamp_inverse_circconv_forward.1} parent=11 // pred_check
          %p149 = pneg %p35
        $region14: #{vamp_inverse_circconv_forward.1} parent=11 // pred_check_branch
          %151 = sbr.rel (%p149) target = $region16
        $region15: #{vamp_inverse_circconv_forward.1} parent=11 // pred_region
          _
        $region16: #{vamp_inverse_circconv_forward.1} parent=11 // pred_fallthru
          _
        // Predicated region
        $region17: #{vamp_inverse_circconv_forward.1} parent=11 // pred_check
          %p152 = pneg %p108
        $region18: #{vamp_inverse_circconv_forward.1} parent=11 // pred_check_branch
          %154 = sbr.rel (%p152) target = $region20
        $region19: #{vamp_inverse_circconv_forward.1} parent=11 // pred_region
          _
        $region20: #{vamp_inverse_circconv_forward.1} parent=11 // pred_fallthru
          _
      $region12: #{vamp_inverse_circconv_forward.1} parent=5 // pred_fallthru
        _
      %p155 = scmp.lt.s32.totalorder %s14, 2
      // Predicated region
      $region21: #{vamp_inverse_circconv_forward.1} parent=5 // pred_check
        %p156 = pneg %p155
      $region22: #{vamp_inverse_circconv_forward.1} parent=5 // pred_check_branch
        %158 = sbr.rel (%p156) target = $region24
      $region23: #{vamp_inverse_circconv_forward.1} parent=5 // pred_region
        // Predicated region
        $region25: #{vamp_inverse_circconv_forward.1} parent=23 // pred_check
          %p159 = pneg %p55
        $region26: #{vamp_inverse_circconv_forward.1} parent=23 // pred_check_branch
          %161 = sbr.rel (%p159) target = $region28
        $region27: #{vamp_inverse_circconv_forward.1} parent=23 // pred_region
          %s162 = smul.u32 2, %s14
          %p163 = scmp.lt.s32.totalorder %s162, 3
          %s164 = scalar_select %p163, %s162, 3
          %s165 = smul.addr %s164, 8
          %s166 = scalar_lea.vmem %s1, %s165
          %s167 = smul.u32 2, %s14
        $region28: #{vamp_inverse_circconv_forward.1} parent=23 // pred_fallthru
          _
        // Predicated region
        $region29: #{vamp_inverse_circconv_forward.1} parent=23 // pred_check
          %p168 = pneg %p81
        $region30: #{vamp_inverse_circconv_forward.1} parent=23 // pred_check_branch
          %170 = sbr.rel (%p168) target = $region32
        $region31: #{vamp_inverse_circconv_forward.1} parent=23 // pred_region
          %s171 = sand.u32 %s71, 1
          %s172 = scalar_lea.sflag [#allocation4], %s171
          %s173 = sand.u32 %s71, 1
          %s174 = smul.addr %s173, 512
          %s175 = scalar_lea.vmem [#allocation3], %s174
          %s176 = smul.u32 2, %s14
          %s178 = ssub.s32 8192, 8192
          %179 = vsyncadd %s172, %s178
          %s180 = smul.addr %s176, 64
          %s181 = scalar_lea.hbm %s2, %s180
          %s182 = sshll.u32 %s175, 4
          %s183 = int_to_ptr.vmem [resolvable:$true] %s182
          %188 = dma.hbm_to_vmem [thread:$0]  %s181, 8192, %s183, %s172, 256, 128, 8
        $region32: #{vamp_inverse_circconv_forward.1} parent=23 // pred_fallthru
          _
      $region24: #{vamp_inverse_circconv_forward.1} parent=5 // pred_fallthru
        _
      %p189 = scmp.le.s32.totalorder 1, %s14
      %p190 = scmp.lt.s32.totalorder %s14, 3
      %p191 = pnand %p189, %p190
      %p192 = pneg %p191
      // Predicated region
      $region33: #{vamp_inverse_circconv_forward.1} parent=5 // pred_check
        _
      $region34: #{vamp_inverse_circconv_forward.1} parent=5 // pred_check_branch
        %194 = sbr.rel (%p191) target = $region36
      $region35: #{vamp_inverse_circconv_forward.1} parent=5 // pred_region
        %s195 = ssub.s32 %s14, 1
        %s196 = sand.u32 %s74, 1
        %s197 = scalar_lea.sflag [#allocation4], %s196
        %s198 = sand.u32 %s74, 1
        %s199 = smul.addr %s198, 512
        %s200 = scalar_lea.vmem [#allocation3], %s199
        // Predicated region
        $region37: #{vamp_inverse_circconv_forward.1} parent=35 // pred_check
          %p201 = pneg %p87
        $region38: #{vamp_inverse_circconv_forward.1} parent=35 // pred_check_branch
          %203 = sbr.rel (%p201) target = $region40
        $region39: #{vamp_inverse_circconv_forward.1} parent=35 // pred_region
          %204 = dma.done %s197, 8192
        $region40: #{vamp_inverse_circconv_forward.1} parent=35 // pred_fallthru
          _
        %p205 = pneg %p35
        %p206 = pneg %p32
        %s207 = smul.u32 2, %s19
        %p208 = scmp.lt.s32.totalorder %s207, 3
        %s209 = scalar_select %p208, %s207, 3
        %s210 = smul.addr %s209, 8
        %s211 = scalar_lea.vmem %s1, %s210
        %p212 = pneg %p61
        %p213 = pneg %p58
        %s214 = sand.u32 %s74, 1
        %s215 = scalar_lea.sflag [#allocation4], %s214
        %s216 = sand.u32 %s74, 1
        %s217 = smul.addr %s216, 512
        %s218 = scalar_lea.vmem [#allocation3], %s217
        %p219 = pneg %p87
        %p220 = pneg %p84
        %p221 = pneg %p108
        %p222 = pneg %p105
        %p223 = pneg %p134
        %p224 = pneg %p131
        %s225 = smul.u32 2, %s19
        %p226 = scmp.lt.s32.totalorder %s225, 3
        %s227 = scalar_select %p226, %s225, 3
        %s228 = smul.addr %s227, 8
        %s229 = scalar_lea.vmem %s4, %s228
        %s230 = smul.u32 2, %s19
        %p231 = scmp.lt.s32.totalorder %s230, 3
        %s232 = scalar_select %p231, %s230, 3
        %s233 = smul.addr %s232, 8
        %s234 = scalar_lea.vmem %s1, %s233
        %s235 = smul.u32 2, %s19
        %s236 = smul.u32 2, %s19
        %s237 = smul.u32 2, %s19
        %p238 = scmp.lt.s32.totalorder %s237, 3
        %s239 = scalar_select %p238, %s237, 3
        %s240 = smul.addr %s239, 8
        %s241 = scalar_lea.vmem %s4, %s240
        %s242 = smul.u32 2, %s19
        %v243 = vld [vmem:[%s0] sm:$0xff]
        %v244 = vld [vmem:[%s0 + $0x8] sm:$0xff]
        %v245 = vld [vmem:[%s200] sm:$0xff]
        %v246 = vld [vmem:[%s200 + $0x8] sm:$0xff]
        %v247 = vld [vmem:[%s200 + $0x10] sm:$0xff]
        %v248 = vld [vmem:[%s200 + $0x18] sm:$0xff]
        %v249 = vld [vmem:[%s200 + $0x20] sm:$0xff]
        %v250 = vld [vmem:[%s200 + $0x28] sm:$0xff]
        %v251 = vld [vmem:[%s200 + $0x30] sm:$0xff]
        %v252 = vld [vmem:[%s200 + $0x38] sm:$0xff]
        %v253 = vld [vmem:[%s200 + $0x40] sm:$0xff]
        %v254 = vld [vmem:[%s200 + $0x48] sm:$0xff]
        %v255 = vld [vmem:[%s200 + $0x50] sm:$0xff]
        %v256 = vld [vmem:[%s200 + $0x58] sm:$0xff]
        %v257 = vld [vmem:[%s200 + $0x60] sm:$0xff]
        %v258 = vld [vmem:[%s200 + $0x68] sm:$0xff]
        %v259 = vld [vmem:[%s200 + $0x70] sm:$0xff]
        %v260 = vld [vmem:[%s200 + $0x78] sm:$0xff]
        %v261 = vld [vmem:[%s200 + $0x80] sm:$0xff]
        %v262 = vld [vmem:[%s200 + $0x88] sm:$0xff]
        %v263 = vld [vmem:[%s200 + $0x90] sm:$0xff]
        %v264 = vld [vmem:[%s200 + $0x98] sm:$0xff]
        %v265 = vld [vmem:[%s200 + $0xa0] sm:$0xff]
        %v266 = vld [vmem:[%s200 + $0xa8] sm:$0xff]
        %v267 = vld [vmem:[%s200 + $0xb0] sm:$0xff]
        %v268 = vld [vmem:[%s200 + $0xb8] sm:$0xff]
        %v269 = vld [vmem:[%s200 + $0xc0] sm:$0xff]
        %v270 = vld [vmem:[%s200 + $0xc8] sm:$0xff]
        %v271 = vld [vmem:[%s200 + $0xd0] sm:$0xff]
        %v272 = vld [vmem:[%s200 + $0xd8] sm:$0xff]
        %v273 = vld [vmem:[%s200 + $0xe0] sm:$0xff]
        %v274 = vld [vmem:[%s200 + $0xe8] sm:$0xff]
        %v275 = vld [vmem:[%s200 + $0xf0] sm:$0xff]
        %v276 = vld [vmem:[%s200 + $0xf8] sm:$0xff]
        %v277 = vld [vmem:[%s200 + $0x100] sm:$0xff]
        %v278 = vld [vmem:[%s200 + $0x108] sm:$0xff]
        %v279 = vld [vmem:[%s200 + $0x110] sm:$0xff]
        %v280 = vld [vmem:[%s200 + $0x118] sm:$0xff]
        %v281 = vld [vmem:[%s200 + $0x120] sm:$0xff]
        %v282 = vld [vmem:[%s200 + $0x128] sm:$0xff]
        %v283 = vld [vmem:[%s200 + $0x130] sm:$0xff]
        %v284 = vld [vmem:[%s200 + $0x138] sm:$0xff]
        %v285 = vld [vmem:[%s200 + $0x140] sm:$0xff]
        %v286 = vld [vmem:[%s200 + $0x148] sm:$0xff]
        %v287 = vld [vmem:[%s200 + $0x150] sm:$0xff]
        %v288 = vld [vmem:[%s200 + $0x158] sm:$0xff]
        %v289 = vld [vmem:[%s200 + $0x160] sm:$0xff]
        %v290 = vld [vmem:[%s200 + $0x168] sm:$0xff]
        %v291 = vld [vmem:[%s200 + $0x170] sm:$0xff]
        %v292 = vld [vmem:[%s200 + $0x178] sm:$0xff]
        %v293 = vld [vmem:[%s200 + $0x180] sm:$0xff]
        %v294 = vld [vmem:[%s200 + $0x188] sm:$0xff]
        %v295 = vld [vmem:[%s200 + $0x190] sm:$0xff]
        %v296 = vld [vmem:[%s200 + $0x198] sm:$0xff]
        %v297 = vld [vmem:[%s200 + $0x1a0] sm:$0xff]
        %v298 = vld [vmem:[%s200 + $0x1a8] sm:$0xff]
        %v299 = vld [vmem:[%s200 + $0x1b0] sm:$0xff]
        %v300 = vld [vmem:[%s200 + $0x1b8] sm:$0xff]
        %v301 = vld [vmem:[%s200 + $0x1c0] sm:$0xff]
        %v302 = vld [vmem:[%s200 + $0x1c8] sm:$0xff]
        %v303 = vld [vmem:[%s200 + $0x1d0] sm:$0xff]
        %v304 = vld [vmem:[%s200 + $0x1d8] sm:$0xff]
        %v305 = vld [vmem:[%s200 + $0x1e0] sm:$0xff]
        %v306 = vld [vmem:[%s200 + $0x1e8] sm:$0xff]
        %v307 = vld [vmem:[%s200 + $0x1f0] sm:$0xff]
        %v308 = vld [vmem:[%s200 + $0x1f8] sm:$0xff]
        %v311 = vunpack.c.l.b16 %v243
        %v312 = vunpack.c.h.b16 %v243
        %v313 = vunpack.c.l.b16 %v244
        %v314 = vunpack.c.h.b16 %v244
        %v315 = vpack.c.b16 %v311, %v311
        %v316 = vpack.c.b16 %v312, %v312
        %v317 = vpack.c.b16 %v313, %v313
        %v318 = vpack.c.b16 %v314, %v314
        %v387 = vunpack.c.l.b16 %v245
        %v388 = vunpack.c.h.b16 %v245
        %v389 = vunpack.c.l.b16 %v246
        %v390 = vunpack.c.h.b16 %v246
        %v391 = vunpack.c.l.b16 %v247
        %v392 = vunpack.c.h.b16 %v247
        %v393 = vunpack.c.l.b16 %v248
        %v394 = vunpack.c.h.b16 %v248
        %v395 = vunpack.c.l.b16 %v249
        %v396 = vunpack.c.h.b16 %v249
        %v397 = vunpack.c.l.b16 %v250
        %v398 = vunpack.c.h.b16 %v250
        %v399 = vunpack.c.l.b16 %v251
        %v400 = vunpack.c.h.b16 %v251
        %v401 = vunpack.c.l.b16 %v252
        %v402 = vunpack.c.h.b16 %v252
        %v403 = vunpack.c.l.b16 %v253
        %v404 = vunpack.c.h.b16 %v253
        %v405 = vunpack.c.l.b16 %v254
        %v406 = vunpack.c.h.b16 %v254
        %v407 = vunpack.c.l.b16 %v255
        %v408 = vunpack.c.h.b16 %v255
        %v409 = vunpack.c.l.b16 %v256
        %v410 = vunpack.c.h.b16 %v256
        %v411 = vunpack.c.l.b16 %v257
        %v412 = vunpack.c.h.b16 %v257
        %v413 = vunpack.c.l.b16 %v258
        %v414 = vunpack.c.h.b16 %v258
        %v415 = vunpack.c.l.b16 %v259
        %v416 = vunpack.c.h.b16 %v259
        %v417 = vunpack.c.l.b16 %v260
        %v418 = vunpack.c.h.b16 %v260
        %v419 = vunpack.c.l.b16 %v261
        %v420 = vunpack.c.h.b16 %v261
        %v421 = vunpack.c.l.b16 %v262
        %v422 = vunpack.c.h.b16 %v262
        %v423 = vunpack.c.l.b16 %v263
        %v424 = vunpack.c.h.b16 %v263
        %v425 = vunpack.c.l.b16 %v264
        %v426 = vunpack.c.h.b16 %v264
        %v427 = vunpack.c.l.b16 %v265
        %v428 = vunpack.c.h.b16 %v265
        %v429 = vunpack.c.l.b16 %v266
        %v430 = vunpack.c.h.b16 %v266
        %v431 = vunpack.c.l.b16 %v267
        %v432 = vunpack.c.h.b16 %v267
        %v433 = vunpack.c.l.b16 %v268
        %v434 = vunpack.c.h.b16 %v268
        %v435 = vunpack.c.l.b16 %v269
        %v436 = vunpack.c.h.b16 %v269
        %v437 = vunpack.c.l.b16 %v270
        %v438 = vunpack.c.h.b16 %v270
        %v439 = vunpack.c.l.b16 %v271
        %v440 = vunpack.c.h.b16 %v271
        %v441 = vunpack.c.l.b16 %v272
        %v442 = vunpack.c.h.b16 %v272
        %v443 = vunpack.c.l.b16 %v273
        %v444 = vunpack.c.h.b16 %v273
        %v445 = vunpack.c.l.b16 %v274
        %v446 = vunpack.c.h.b16 %v274
        %v447 = vunpack.c.l.b16 %v275
        %v448 = vunpack.c.h.b16 %v275
        %v449 = vunpack.c.l.b16 %v276
        %v450 = vunpack.c.h.b16 %v276
        %v451 = vunpack.c.l.b16 %v277
        %v452 = vunpack.c.h.b16 %v277
        %v453 = vunpack.c.l.b16 %v278
        %v454 = vunpack.c.h.b16 %v278
        %v455 = vunpack.c.l.b16 %v279
        %v456 = vunpack.c.h.b16 %v279
        %v457 = vunpack.c.l.b16 %v280
        %v458 = vunpack.c.h.b16 %v280
        %v459 = vunpack.c.l.b16 %v281
        %v460 = vunpack.c.h.b16 %v281
        %v461 = vunpack.c.l.b16 %v282
        %v462 = vunpack.c.h.b16 %v282
        %v463 = vunpack.c.l.b16 %v283
        %v464 = vunpack.c.h.b16 %v283
        %v465 = vunpack.c.l.b16 %v284
        %v466 = vunpack.c.h.b16 %v284
        %v467 = vunpack.c.l.b16 %v285
        %v468 = vunpack.c.h.b16 %v285
        %v469 = vunpack.c.l.b16 %v286
        %v470 = vunpack.c.h.b16 %v286
        %v471 = vunpack.c.l.b16 %v287
        %v472 = vunpack.c.h.b16 %v287
        %v473 = vunpack.c.l.b16 %v288
        %v474 = vunpack.c.h.b16 %v288
        %v475 = vunpack.c.l.b16 %v289
        %v476 = vunpack.c.h.b16 %v289
        %v477 = vunpack.c.l.b16 %v290
        %v478 = vunpack.c.h.b16 %v290
        %v479 = vunpack.c.l.b16 %v291
        %v480 = vunpack.c.h.b16 %v291
        %v481 = vunpack.c.l.b16 %v292
        %v482 = vunpack.c.h.b16 %v292
        %v483 = vunpack.c.l.b16 %v293
        %v484 = vunpack.c.h.b16 %v293
        %v485 = vunpack.c.l.b16 %v294
        %v486 = vunpack.c.h.b16 %v294
        %v487 = vunpack.c.l.b16 %v295
        %v488 = vunpack.c.h.b16 %v295
        %v489 = vunpack.c.l.b16 %v296
        %v490 = vunpack.c.h.b16 %v296
        %v491 = vunpack.c.l.b16 %v297
        %v492 = vunpack.c.h.b16 %v297
        %v493 = vunpack.c.l.b16 %v298
        %v494 = vunpack.c.h.b16 %v298
        %v495 = vunpack.c.l.b16 %v299
        %v496 = vunpack.c.h.b16 %v299
        %v497 = vunpack.c.l.b16 %v300
        %v498 = vunpack.c.h.b16 %v300
        %v499 = vunpack.c.l.b16 %v301
        %v500 = vunpack.c.h.b16 %v301
        %v501 = vunpack.c.l.b16 %v302
        %v502 = vunpack.c.h.b16 %v302
        %v503 = vunpack.c.l.b16 %v303
        %v504 = vunpack.c.h.b16 %v303
        %v505 = vunpack.c.l.b16 %v304
        %v506 = vunpack.c.h.b16 %v304
        %v507 = vunpack.c.l.b16 %v305
        %v508 = vunpack.c.h.b16 %v305
        %v509 = vunpack.c.l.b16 %v306
        %v510 = vunpack.c.h.b16 %v306
        %v511 = vunpack.c.l.b16 %v307
        %v512 = vunpack.c.h.b16 %v307
        %v513 = vunpack.c.l.b16 %v308
        %v514 = vunpack.c.h.b16 %v308
        %v515 = vpack.c.b16 %v389, %v387
        %v516 = vpack.c.b16 %v390, %v388
        %v517 = vpack.c.b16 %v393, %v391
        %v518 = vpack.c.b16 %v394, %v392
        %v519 = vpack.c.b16 %v397, %v395
        %v520 = vpack.c.b16 %v398, %v396
        %v521 = vpack.c.b16 %v401, %v399
        %v522 = vpack.c.b16 %v402, %v400
        %v523 = vpack.c.b16 %v405, %v403
        %v524 = vpack.c.b16 %v406, %v404
        %v525 = vpack.c.b16 %v409, %v407
        %v526 = vpack.c.b16 %v410, %v408
        %v527 = vpack.c.b16 %v413, %v411
        %v528 = vpack.c.b16 %v414, %v412
        %v529 = vpack.c.b16 %v417, %v415
        %v530 = vpack.c.b16 %v418, %v416
        %v531 = vpack.c.b16 %v421, %v419
        %v532 = vpack.c.b16 %v422, %v420
        %v533 = vpack.c.b16 %v425, %v423
        %v534 = vpack.c.b16 %v426, %v424
        %v535 = vpack.c.b16 %v429, %v427
        %v536 = vpack.c.b16 %v430, %v428
        %v537 = vpack.c.b16 %v433, %v431
        %v538 = vpack.c.b16 %v434, %v432
        %v539 = vpack.c.b16 %v437, %v435
        %v540 = vpack.c.b16 %v438, %v436
        %v541 = vpack.c.b16 %v441, %v439
        %v542 = vpack.c.b16 %v442, %v440
        %v543 = vpack.c.b16 %v445, %v443
        %v544 = vpack.c.b16 %v446, %v444
        %v545 = vpack.c.b16 %v449, %v447
        %v546 = vpack.c.b16 %v450, %v448
        %v547 = vpack.c.b16 %v453, %v451
        %v548 = vpack.c.b16 %v454, %v452
        %v549 = vpack.c.b16 %v457, %v455
        %v550 = vpack.c.b16 %v458, %v456
        %v551 = vpack.c.b16 %v461, %v459
        %v552 = vpack.c.b16 %v462, %v460
        %v553 = vpack.c.b16 %v465, %v463
        %v554 = vpack.c.b16 %v466, %v464
        %v555 = vpack.c.b16 %v469, %v467
        %v556 = vpack.c.b16 %v470, %v468
        %v557 = vpack.c.b16 %v473, %v471
        %v558 = vpack.c.b16 %v474, %v472
        %v559 = vpack.c.b16 %v477, %v475
        %v560 = vpack.c.b16 %v478, %v476
        %v561 = vpack.c.b16 %v481, %v479
        %v562 = vpack.c.b16 %v482, %v480
        %v563 = vpack.c.b16 %v485, %v483
        %v564 = vpack.c.b16 %v486, %v484
        %v565 = vpack.c.b16 %v489, %v487
        %v566 = vpack.c.b16 %v490, %v488
        %v567 = vpack.c.b16 %v493, %v491
        %v568 = vpack.c.b16 %v494, %v492
        %v569 = vpack.c.b16 %v497, %v495
        %v570 = vpack.c.b16 %v498, %v496
        %v571 = vpack.c.b16 %v501, %v499
        %v572 = vpack.c.b16 %v502, %v500
        %v573 = vpack.c.b16 %v505, %v503
        %v574 = vpack.c.b16 %v506, %v504
        %v575 = vpack.c.b16 %v509, %v507
        %v576 = vpack.c.b16 %v510, %v508
        %v577 = vpack.c.b16 %v513, %v511
        %v578 = vpack.c.b16 %v514, %v512
        %643 = vmatprep.subr.bf16.mxu0 %v516
        %644 = vmatpush1.bf16.msra.mxu0 %v515
        %645 = vmatprep.subr.bf16.mxu0 %v518
        %646 = vmatpush1.bf16.msra.mxu0 %v517
        %647 = vmatprep.subr.bf16.mxu0 %v520
        %648 = vmatpush1.bf16.msra.mxu0 %v519
        %649 = vmatprep.subr.bf16.mxu0 %v522
        %650 = vmatpush1.bf16.msra.mxu0 %v521
        %651 = vmatprep.subr.bf16.mxu0 %v524
        %652 = vmatpush1.bf16.msra.mxu0 %v523
        %653 = vmatprep.subr.bf16.mxu0 %v526
        %654 = vmatpush1.bf16.msra.mxu0 %v525
        %655 = vmatprep.subr.bf16.mxu0 %v528
        %656 = vmatpush1.bf16.msra.mxu0 %v527
        %657 = vmatprep.subr.bf16.mxu0 %v530
        %658 = vmatpush1.bf16.msra.mxu0 %v529
        %659 = vmatprep.subr.bf16.mxu0 %v532
        %660 = vmatpush1.bf16.msra.mxu0 %v531
        %661 = vmatprep.subr.bf16.mxu0 %v534
        %662 = vmatpush1.bf16.msra.mxu0 %v533
        %663 = vmatprep.subr.bf16.mxu0 %v536
        %664 = vmatpush1.bf16.msra.mxu0 %v535
        %665 = vmatprep.subr.bf16.mxu0 %v538
        %666 = vmatpush1.bf16.msra.mxu0 %v537
        %667 = vmatprep.subr.bf16.mxu0 %v540
        %668 = vmatpush1.bf16.msra.mxu0 %v539
        %669 = vmatprep.subr.bf16.mxu0 %v542
        %670 = vmatpush1.bf16.msra.mxu0 %v541
        %671 = vmatprep.subr.bf16.mxu0 %v544
        %672 = vmatpush1.bf16.msra.mxu0 %v543
        %673 = vmatprep.subr.bf16.mxu0 %v546
        %674 = vmatpush1.bf16.msra.mxu0 %v545
        %675 = vmatprep.mubr.bf16.mxu0 %v316
        %676 = vmatmul.mubr.bf16.gmra.mrb[0].mxu0 %v315
        %v677 = vpop.f32.mrb[0].mxu0
        %v678 = vadd.f32 0.0, %v677
        %v679 = vpop.f32.mrb[0].mxu0
        %v680 = vadd.f32 0.0, %v679
        %v681 = vpop.f32.mrb[0].mxu0
        %v682 = vpop.f32.mrb[0].mxu0
        %683 = vdwg.mxu0
        %684 = vmatprep.subr.bf16.mxu0 %v548
        %685 = vmatpush1.bf16.msra.mxu0 %v547
        %686 = vmatprep.subr.bf16.mxu0 %v550
        %687 = vmatpush1.bf16.msra.mxu0 %v549
        %688 = vmatprep.subr.bf16.mxu0 %v552
        %689 = vmatpush1.bf16.msra.mxu0 %v551
        %690 = vmatprep.subr.bf16.mxu0 %v554
        %691 = vmatpush1.bf16.msra.mxu0 %v553
        %692 = vmatprep.subr.bf16.mxu0 %v556
        %693 = vmatpush1.bf16.msra.mxu0 %v555
        %694 = vmatprep.subr.bf16.mxu0 %v558
        %695 = vmatpush1.bf16.msra.mxu0 %v557
        %696 = vmatprep.subr.bf16.mxu0 %v560
        %697 = vmatpush1.bf16.msra.mxu0 %v559
        %698 = vmatprep.subr.bf16.mxu0 %v562
        %699 = vmatpush1.bf16.msra.mxu0 %v561
        %700 = vmatprep.subr.bf16.mxu0 %v564
        %701 = vmatpush1.bf16.msra.mxu0 %v563
        %702 = vmatprep.subr.bf16.mxu0 %v566
        %703 = vmatpush1.bf16.msra.mxu0 %v565
        %704 = vmatprep.subr.bf16.mxu0 %v568
        %705 = vmatpush1.bf16.msra.mxu0 %v567
        %706 = vmatprep.subr.bf16.mxu0 %v570
        %707 = vmatpush1.bf16.msra.mxu0 %v569
        %708 = vmatprep.subr.bf16.mxu0 %v572
        %709 = vmatpush1.bf16.msra.mxu0 %v571
        %710 = vmatprep.subr.bf16.mxu0 %v574
        %711 = vmatpush1.bf16.msra.mxu0 %v573
        %712 = vmatprep.subr.bf16.mxu0 %v576
        %713 = vmatpush1.bf16.msra.mxu0 %v575
        %714 = vmatprep.subr.bf16.mxu0 %v578
        %715 = vmatpush1.bf16.msra.mxu0 %v577
        %716 = vmatprep.mubr.bf16.mxu0 %v318
        %717 = vmatmul.mubr.bf16.gmra.mrb[0].mxu0 %v317
        %v718 = vpop.f32.mrb[0].mxu0
        %v719 = vadd.f32 %v678, %v718
        %v720 = vpop.f32.mrb[0].mxu0
        %v721 = vadd.f32 %v680, %v720
        %v722 = vpop.f32.mrb[0].mxu0
        %v723 = vpop.f32.mrb[0].mxu0
        %724 = vdwg.mxu0
        %s725 = sld [smem:[#allocation2]]
        %v726 = vld [vmem:[%s234] sm:$0xff]
        %v727 = vld [vmem:[%s234 + $0x8] sm:$0xff]
        %v728 = vstv %s725
        %v729 = vmul.f32 %v728, %v726
        %v730 = vmul.f32 %v728, %v727
        %v731 = vadd.f32 %v729, %v719
        %v732 = vadd.f32 %v730, %v721
        %733 = vst [vmem:[%s241] sm:$0xff] %v731
        %734 = vst [vmem:[%s241 + $0x8] sm:$0xff] %v732
        %s735 = smul.u32 2, %s19
        %p736 = scmp.lt.s32.totalorder %s735, 3
        %s737 = scalar_select %p736, %s735, 3
        %s738 = smul.addr %s737, 8
        %s739 = scalar_lea.vmem %s4, %s738
        // Predicated region
        $region41: #{vamp_inverse_circconv_forward.1} parent=35 // pred_check
          %p740 = pneg %p131
        $region42: #{vamp_inverse_circconv_forward.1} parent=35 // pred_check_branch
          %742 = sbr.rel (%p740) target = $region44
        $region43: #{vamp_inverse_circconv_forward.1} parent=35 // pred_region
          %s743 = smul.u32 2, %s19
        $region44: #{vamp_inverse_circconv_forward.1} parent=35 // pred_fallthru
          _
      $region36: #{vamp_inverse_circconv_forward.1} parent=5 // pred_fallthru
        _
      %p744 = scmp.le.s32.totalorder 2, %s14
      // Predicated region
      $region45: #{vamp_inverse_circconv_forward.1} parent=5 // pred_check
        %p745 = pneg %p744
      $region46: #{vamp_inverse_circconv_forward.1} parent=5 // pred_check_branch
        %747 = sbr.rel (%p745) target = $region48
      $region47: #{vamp_inverse_circconv_forward.1} parent=5 // pred_region
        %s748 = ssub.s32 %s14, 2
        // Predicated region
        $region49: #{vamp_inverse_circconv_forward.1} parent=47 // pred_check
          %p749 = pneg %p137
        $region50: #{vamp_inverse_circconv_forward.1} parent=47 // pred_check_branch
          %751 = sbr.rel (%p749) target = $region52
        $region51: #{vamp_inverse_circconv_forward.1} parent=47 // pred_region
          %s752 = smul.u32 2, %s20
          %p753 = scmp.lt.s32.totalorder %s752, 3
          %s754 = scalar_select %p753, %s752, 3
          %s755 = smul.addr %s754, 8
          %s756 = scalar_lea.vmem %s4, %s755
        $region52: #{vamp_inverse_circconv_forward.1} parent=47 // pred_fallthru
          _
      $region48: #{vamp_inverse_circconv_forward.1} parent=5 // pred_fallthru
        _
    $region6: #{vamp_inverse_circconv_forward.1} parent=1 // loop_footer
      %s18 = sadd.s32 1, %s14
    $region7: #{vamp_inverse_circconv_forward.1} parent=1 // loop_footer_branch
      %13 = sbr.rel target = $region3
    $region8: #{vamp_inverse_circconv_forward.1} parent=1 // loop_exit
      _
    %757 = vsyncpa [#allocation4], 1
    %s758 = scalar_lea.sflag [#allocation4], 1
    %759 = vsyncpa %s758, 1

</llo_original>
